<compile_context>
chip_gen: v7x
topology: tpu7x:2x2x1
jax: 0.10.0
libtpu: 0.0.40
codegen_flags: <defaults>
</compile_context>

<pallas_src>
import math

import jax
import jax.numpy as jnp
from jax.experimental import pallas as pl
from jax.experimental.pallas import tpu as pltpu

_LANE = 128      # vreg lane width (last dim)
_SUBLANE = 8     # f32 sublane height (second-to-last dim)


def _round_up(n, m):
    return ((n + m - 1) // m) * m


def _cdiv(a, b):
    return (a + b - 1) // b


def _vmem_budget_bytes():
    """~80% of this generation's physical VMEM (fallback: v7x's 64 MiB/TC)."""
    cap = 64 << 20
    try:
        info = pltpu.get_tpu_info()
        cap = int(getattr(info, "vmem_capacity_bytes", cap)) or cap
    except Exception:
        pass
    return int(0.8 * cap)


def mlp_kernel(x_ref, w1_ref, b1_ref, w2_ref, b2_ref, w3_ref, b3_ref, o_ref):
    """fc1 -> ReLU -> fc2 -> ReLU -> fc3 on one (tm, *) batch tile."""
    # fc_1 + ReLU   (dropout1 is identity at inference).  MXU matmul with f32
    # accumulation; bias add / ReLU stay in f32 on the VPU.
    h = jnp.dot(x_ref[...], w1_ref[...], preferred_element_type=jnp.float32)
    h = jnp.maximum(h + b1_ref[...], 0.0)
    # fc_2 + ReLU   (dropout2 is identity at inference).  Cast activations back
    # to the MXU operand dtype only at the dot boundary.
    h = jnp.dot(h.astype(w2_ref.dtype), w2_ref[...],
                preferred_element_type=jnp.float32)
    h = jnp.maximum(h + b2_ref[...], 0.0)
    # fc_3 (no activation); output last dim is the true (unpadded) n_actions.
    out = jnp.dot(h.astype(w3_ref.dtype), w3_ref[...],
                  preferred_element_type=jnp.float32)
    o_ref[...] = (out + b3_ref[...]).astype(o_ref.dtype)


def _resident_bytes(din_p, h_p, a, mxu_itemsize):
    """VMEM held by the single-buffered, grid-invariant weights / biases."""
    weights = (din_p * h_p + h_p * h_p + h_p * a) * mxu_itemsize
    biases = (2 * h_p + a) * 4
    return weights + biases


def _tile_bytes(tm, din_p, h_p, a, mxu_itemsize, x_buffers, out_itemsize):
    """VMEM for one grid step: pipelined x / out tiles + live f32 values."""
    x_tiles = x_buffers * tm * din_p * mxu_itemsize      # pipelined x tile
    o_tiles = 2 * tm * a * out_itemsize                  # pipelined out tile
    live = 3 * tm * h_p * 4 + tm * a * 4                 # h buffers + pre-store
    return x_tiles + o_tiles + live


def prepare_params(params, *, mxu_dtype=jnp.bfloat16):
    """One-time pad+cast of weights/biases (hoisted out of the per-call path).

    Feature dims are zero-padded to the 128-lane vreg width for lane-dense MXU
    operands; zero rows/cols + zero padded bias keep padded lanes exactly zero
    through matmul + ReLU.  The output (n_actions) dim stays unpadded.
    """
    w1, b1, w2, b2, w3, b3 = (
        params["w1"], params["b1"], params["w2"],
        params["b2"], params["w3"], params["b3"],
    )
    din, h = w1.shape
    a = w3.shape[1]
    din_p = _round_up(din, _LANE)
    h_p = _round_up(h, _LANE)
    f32 = jnp.float32
    return {
        "_prepared": True,
        "mxu_dtype": jnp.dtype(mxu_dtype),
        "din": din, "h": h, "a": a, "din_p": din_p, "h_p": h_p,
        "w1": jnp.pad(w1.astype(f32),
                      ((0, din_p - din), (0, h_p - h))).astype(mxu_dtype),
        "w2": jnp.pad(w2.astype(f32),
                      ((0, h_p - h), (0, h_p - h))).astype(mxu_dtype),
        "w3": jnp.pad(w3.astype(f32),
                      ((0, h_p - h), (0, 0))).astype(mxu_dtype),
        # Biases stay f32; padded columns are zero so ReLU(0 + 0) = 0 exactly.
        "b1": jnp.pad(b1.reshape(1, -1).astype(f32), ((0, 0), (0, h_p - h))),
        "b2": jnp.pad(b2.reshape(1, -1).astype(f32), ((0, 0), (0, h_p - h))),
        "b3": b3.reshape(1, -1).astype(f32),
    }


def linear_deep_network_no_activation(x, params, *, mxu_dtype=jnp.bfloat16,
                                      max_batch_tile=1024, x_buffers=2):
    """x: (B, input_dims) float32.

    `params` is either the raw dict from init_params() or the result of
    prepare_params() (preferred for repeated calls: padding/casting is done
    once).  When prepared params are passed, their mxu_dtype is used.
    """
    if not params.get("_prepared", False):
        params = prepare_params(params, mxu_dtype=mxu_dtype)
    mxu_dtype = params["mxu_dtype"]
    din, h, a = params["din"], params["h"], params["a"]
    din_p, h_p = params["din_p"], params["h_p"]
    B = x.shape[0]
    assert x.shape[1] == din, f"expected input_dims={din}, got {x.shape[1]}"

    mxu_itemsize = jnp.dtype(mxu_dtype).itemsize
    out_dtype = jnp.float32
    out_itemsize = jnp.dtype(out_dtype).itemsize
    budget = _vmem_budget_bytes()

    resident = _resident_bytes(din_p, h_p, a, mxu_itemsize)
    if resident + _tile_bytes(_SUBLANE, din_p, h_p, a, mxu_itemsize,
                              x_buffers, out_itemsize) > budget:
        # TODO(synk): add a hidden-reduction (K-tiled) variant with a VMEM f32
        # accumulator for hidden sizes whose resident weights exceed this
        # generation's VMEM (notably v7x's 64 MiB at hidden_size >= ~4096).
        raise NotImplementedError(
            "hidden_size too large for the whole-weight-resident kernel on "
            "this TPU generation")

    # Batch tile: largest that fits the per-generation budget, but capped so
    # the grid has >= 2 steps whenever B > 8 (lets the 'parallel' batch axis
    # shard across v7x's two TensorCores).
    tm = min(_round_up(B, _SUBLANE), max_batch_tile)
    if B > _SUBLANE:
        tm = min(tm, _round_up(_cdiv(B, 2), _SUBLANE))
    while tm > _SUBLANE and resident + _tile_bytes(
            tm, din_p, h_p, a, mxu_itemsize, x_buffers, out_itemsize) > budget:
        tm = _round_up(tm // 2, _SUBLANE)
    tm = max(tm, _SUBLANE)
    b_p = _round_up(B, tm)
    grid = (b_p // tm,)

    # Pad / cast the activations only when actually needed.
    x_p = x if x.dtype == jnp.float32 else x.astype(jnp.float32)
    if b_p != B or din_p != din:
        x_p = jnp.pad(x_p, ((0, b_p - B), (0, din_p - din)))
    if x_p.dtype != mxu_dtype:
        x_p = x_p.astype(mxu_dtype)

    const = lambda i: (0, 0)
    # Grid-invariant constants: single-buffered (no second pipeline buffer).
    resident_spec = lambda shape: pl.BlockSpec(
        shape, const, pipeline_mode=pl.Buffered(1))
    if x_buffers == 2:
        x_spec = pl.BlockSpec((tm, din_p), lambda i: (i, 0))
    else:  # sweepable if xprof shows exposed x DMA
        x_spec = pl.BlockSpec((tm, din_p), lambda i: (i, 0),
                              pipeline_mode=pl.Buffered(x_buffers))

    flops = int(2 * b_p * (din_p * h_p + h_p * h_p + h_p * a))
    bytes_accessed = int(x_p.size * x_p.dtype.itemsize
                         + b_p * a * out_itemsize
                         + resident)

    out = pl.pallas_call(
        mlp_kernel,
        out_shape=jax.ShapeDtypeStruct((b_p, a), out_dtype),
        grid=grid,
        in_specs=[
            x_spec,                             # x tile (auto-pipelined)
            resident_spec((din_p, h_p)),        # w1
            resident_spec((1, h_p)),            # b1
            resident_spec((h_p, h_p)),          # w2
            resident_spec((1, h_p)),            # b2
            resident_spec((h_p, a)),            # w3 (unpadded output dim)
            resident_spec((1, a)),              # b3
        ],
        out_specs=pl.BlockSpec((tm, a), lambda i: (i, 0)),
        compiler_params=pltpu.CompilerParams(
            dimension_semantics=("parallel",),  # megacore batch sharding
            vmem_limit_bytes=budget,
        ),
        cost_estimate=pl.CostEstimate(flops=flops, transcendentals=0,
                                      bytes_accessed=bytes_accessed),
    )(x_p, params["w1"], params["b1"], params["w2"], params["b2"],
      params["w3"], params["b3"])
    return out if b_p == B else out[:B]


def xavier_uniform(key, fan_in, fan_out, dtype=jnp.float32):
    # Matches torch.nn.init.xavier_uniform_ (gain=1.0).
    bound = math.sqrt(6.0 / (fan_in + fan_out))
    return jax.random.uniform(
        key, (fan_in, fan_out), minval=-bound, maxval=bound, dtype=dtype
    )


def init_params(key, input_dims, hidden_size, n_actions):
    k1, k2, k3 = jax.random.split(key, 3)
    return {
        "w1": xavier_uniform(k1, input_dims, hidden_size),
        "b1": jnp.full((1, hidden_size), 0.01, jnp.float32),
        "w2": xavier_uniform(k2, hidden_size, hidden_size),
        "b2": jnp.full((1, hidden_size), 0.01, jnp.float32),
        "w3": xavier_uniform(k3, hidden_size, n_actions),
        "b3": jnp.full((1, n_actions), 0.01, jnp.float32),
    }


if __name__ == "__main__":
    # Small shapes consistent with the module's forward.
    batch = 8
    input_dims = 16
    hidden_size = 32
    n_actions = 4
    # TODO(synk): training-mode stochastic dropout (p=dropout_ratio) is not
    # implemented; inference-mode (identity) semantics are used.

    key = jax.random.PRNGKey(0)
    pkey, xkey, x2key = jax.random.split(key, 3)
    params = init_params(pkey, input_dims, hidden_size, n_actions)
    x = jax.random.normal(xkey, (batch, input_dims), dtype=jnp.float32)

    def ref_fwd(xx):
        hh = jnp.maximum(xx @ params["w1"] + params["b1"], 0.0)
        hh = jnp.maximum(hh @ params["w2"] + params["b2"], 0.0)
        return hh @ params["w3"] + params["b3"]

    # Exact fp32 MXU-operand path (prepared once, reused across calls).
    prep_f32 = prepare_params(params, mxu_dtype=jnp.float32)
    out_f32 = linear_deep_network_no_activation(x, prep_f32)
    jax.block_until_ready(out_f32)
    assert out_f32.shape == (batch, n_actions)
    assert jnp.allclose(out_f32, ref_fwd(x), atol=1e-5, rtol=1e-5)

    # Fast path: bf16 MXU operands, f32 accumulation + f32 output.
    prep_bf16 = prepare_params(params, mxu_dtype=jnp.bfloat16)
    out_bf16 = linear_deep_network_no_activation(x, prep_bf16)
    jax.block_until_ready(out_bf16)
    assert out_bf16.shape == (batch, n_actions)
    assert jnp.allclose(out_bf16, ref_fwd(x), atol=5e-2, rtol=5e-2)

    # Multi-step grid: exercises Buffered(1) constants across grid steps,
    # batch-row padding, and the >=2-step megacore cap.
    big_batch = 300
    x_big = jax.random.normal(x2key, (big_batch, input_dims), dtype=jnp.float32)
    out_big = linear_deep_network_no_activation(x_big, prep_f32)
    jax.block_until_ready(out_big)
    assert out_big.shape == (big_batch, n_actions)
    assert jnp.allclose(out_big, ref_fwd(x_big), atol=1e-4, rtol=1e-4)

    print("KERNEL_OK")
</pallas_src>

<mosaic_0001>
module attributes {stable_mosaic.version = 11 : i64} {
  func.func @mlp_kernel(%arg0: i32, %arg1: memref<8x128xf32, #tpu.memory_space<vmem>>, %arg2: memref<128x128xf32, #tpu.memory_space<vmem>>, %arg3: memref<1x128xf32, #tpu.memory_space<vmem>>, %arg4: memref<128x128xf32, #tpu.memory_space<vmem>>, %arg5: memref<1x128xf32, #tpu.memory_space<vmem>>, %arg6: memref<128x4xf32, #tpu.memory_space<vmem>>, %arg7: memref<1x4xf32, #tpu.memory_space<vmem>>, %arg8: memref<8x4xf32, #tpu.memory_space<vmem>>) attributes {dimension_semantics = [#tpu.dimension_semantics<parallel>], iteration_bounds = array<i64: 1>, scalar_prefetch = 0 : i64, scratch_operands = 0 : i64, tpu.core_type = #tpu.core_type<tc>, window_params = [{transform_indices = @transform_0, window_bounds = array<i64: 8, 128>}, {pipeline_mode = #tpu.pipeline_mode<synchronous>, transform_indices = @transform_1, window_bounds = array<i64: 128, 128>}, {pipeline_mode = #tpu.pipeline_mode<synchronous>, transform_indices = @transform_2, window_bounds = array<i64: 1, 128>}, {pipeline_mode = #tpu.pipeline_mode<synchronous>, transform_indices = @transform_3, window_bounds = array<i64: 128, 128>}, {pipeline_mode = #tpu.pipeline_mode<synchronous>, transform_indices = @transform_4, window_bounds = array<i64: 1, 128>}, {pipeline_mode = #tpu.pipeline_mode<synchronous>, transform_indices = @transform_5, window_bounds = array<i64: 128, 4>}, {pipeline_mode = #tpu.pipeline_mode<synchronous>, transform_indices = @transform_6, window_bounds = array<i64: 1, 4>}, {transform_indices = @transform_7, window_bounds = array<i64: 8, 4>}]} {
    %c0 = arith.constant 0 : index
    %c0_0 = arith.constant 0 : index
    %0 = vector.load %arg1[%c0, %c0_0] : memref<8x128xf32, #tpu.memory_space<vmem>>, vector<8x128xf32>
    %c0_1 = arith.constant 0 : index
    %c0_2 = arith.constant 0 : index
    %1 = vector.load %arg2[%c0_1, %c0_2] : memref<128x128xf32, #tpu.memory_space<vmem>>, vector<128x128xf32>
    %cst = arith.constant dense<0.000000e+00> : vector<8x128xf32>
    %2 = tpu.matmul %0, %1, %cst {dimension_numbers = #tpu.dot_dimension_numbers<[1], [0], [0], [1], [0, 0, 1, 1], [], []>} : vector<8x128xf32>, vector<128x128xf32>, vector<8x128xf32> -> vector<8x128xf32>
    %c0_3 = arith.constant 0 : index
    %c0_4 = arith.constant 0 : index
    %3 = vector.load %arg3[%c0_3, %c0_4] : memref<1x128xf32, #tpu.memory_space<vmem>>, vector<1x128xf32>
    %4 = vector.broadcast %3 : vector<1x128xf32> to vector<8x128xf32>
    %5 = arith.addf %2, %4 : vector<8x128xf32>
    %cst_5 = arith.constant 0.000000e+00 : f32
    %6 = vector.broadcast %cst_5 : f32 to vector<8x128xf32>
    %7 = arith.maximumf %5, %6 : vector<8x128xf32>
    %c0_6 = arith.constant 0 : index
    %c0_7 = arith.constant 0 : index
    %8 = vector.load %arg4[%c0_6, %c0_7] : memref<128x128xf32, #tpu.memory_space<vmem>>, vector<128x128xf32>
    %cst_8 = arith.constant dense<0.000000e+00> : vector<8x128xf32>
    %9 = tpu.matmul %7, %8, %cst_8 {dimension_numbers = #tpu.dot_dimension_numbers<[1], [0], [0], [1], [0, 0, 1, 1], [], []>} : vector<8x128xf32>, vector<128x128xf32>, vector<8x128xf32> -> vector<8x128xf32>
    %c0_9 = arith.constant 0 : index
    %c0_10 = arith.constant 0 : index
    %10 = vector.load %arg5[%c0_9, %c0_10] : memref<1x128xf32, #tpu.memory_space<vmem>>, vector<1x128xf32>
    %11 = vector.broadcast %10 : vector<1x128xf32> to vector<8x128xf32>
    %12 = arith.addf %9, %11 : vector<8x128xf32>
    %cst_11 = arith.constant 0.000000e+00 : f32
    %13 = vector.broadcast %cst_11 : f32 to vector<8x128xf32>
    %14 = arith.maximumf %12, %13 : vector<8x128xf32>
    %c0_12 = arith.constant 0 : index
    %c0_13 = arith.constant 0 : index
    %15 = vector.load %arg6[%c0_12, %c0_13] : memref<128x4xf32, #tpu.memory_space<vmem>>, vector<128x4xf32>
    %cst_14 = arith.constant dense<0.000000e+00> : vector<8x4xf32>
    %16 = tpu.matmul %14, %15, %cst_14 {dimension_numbers = #tpu.dot_dimension_numbers<[1], [0], [0], [1], [0, 0, 1, 1], [], []>} : vector<8x128xf32>, vector<128x4xf32>, vector<8x4xf32> -> vector<8x4xf32>
    %c0_15 = arith.constant 0 : index
    %c0_16 = arith.constant 0 : index
    %17 = vector.load %arg7[%c0_15, %c0_16] : memref<1x4xf32, #tpu.memory_space<vmem>>, vector<1x4xf32>
    %18 = vector.broadcast %17 : vector<1x4xf32> to vector<8x4xf32>
    %19 = arith.addf %16, %18 : vector<8x4xf32>
    %c0_17 = arith.constant 0 : index
    %c0_18 = arith.constant 0 : index
    %20 = vector.load %arg8[%c0_17, %c0_18] : memref<8x4xf32, #tpu.memory_space<vmem>>, vector<8x4xf32>
    tpu.vector_store %arg8[%c0_17, %c0_18], %19 {strides = array<i32>} : memref<8x4xf32, #tpu.memory_space<vmem>>, vector<8x4xf32>,
    return
  }
  func.func @transform_0(%arg0: i32) -> (i32, i32) {
    %c0_i32 = arith.constant 0 : i32
    %c0_i32_0 = arith.constant 0 : i32
    return %arg0, %c0_i32 : i32, i32
  }
  func.func @transform_1(%arg0: i32) -> (i32, i32) {
    %c0_i32 = arith.constant 0 : i32
    %c0_i32_0 = arith.constant 0 : i32
    %c0_i32_1 = arith.constant 0 : i32
    return %c0_i32, %c0_i32_0 : i32, i32
  }
  func.func @transform_2(%arg0: i32) -> (i32, i32) {
    %c0_i32 = arith.constant 0 : i32
    %c0_i32_0 = arith.constant 0 : i32
    %c0_i32_1 = arith.constant 0 : i32
    return %c0_i32, %c0_i32_0 : i32, i32
  }
  func.func @transform_3(%arg0: i32) -> (i32, i32) {
    %c0_i32 = arith.constant 0 : i32
    %c0_i32_0 = arith.constant 0 : i32
    %c0_i32_1 = arith.constant 0 : i32
    return %c0_i32, %c0_i32_0 : i32, i32
  }
  func.func @transform_4(%arg0: i32) -> (i32, i32) {
    %c0_i32 = arith.constant 0 : i32
    %c0_i32_0 = arith.constant 0 : i32
    %c0_i32_1 = arith.constant 0 : i32
    return %c0_i32, %c0_i32_0 : i32, i32
  }
  func.func @transform_5(%arg0: i32) -> (i32, i32) {
    %c0_i32 = arith.constant 0 : i32
    %c0_i32_0 = arith.constant 0 : i32
    %c0_i32_1 = arith.constant 0 : i32
    return %c0_i32, %c0_i32_0 : i32, i32
  }
  func.func @transform_6(%arg0: i32) -> (i32, i32) {
    %c0_i32 = arith.constant 0 : i32
    %c0_i32_0 = arith.constant 0 : i32
    %c0_i32_1 = arith.constant 0 : i32
    return %c0_i32, %c0_i32_0 : i32, i32
  }
  func.func @transform_7(%arg0: i32) -> (i32, i32) {
    %c0_i32 = arith.constant 0 : i32
    %c0_i32_0 = arith.constant 0 : i32
    return %arg0, %c0_i32 : i32, i32
  }
}

</mosaic_0001>

<llo_original>
// kernel: tpu_custom_call.1
$region0: #{tpu_custom_call.1}
  #allocation0 [shape = 'u32[]', space=smem, size = 0x4, offset = 0x4, fixed_abs, tag = 'smem constant byte address 0x4 - core index']
  #allocation1 [shape = 'u32[144,128]{1,0:T(1,128)}', space=vmem, size = 0x12000, scoped, tag = 'internal scratch']
  %s0 = inlined_call_operand.hbm [shape: f32[8,128], index: 0, kind: input, shape index: {}]
  %s1 = inlined_call_operand.vmem [shape: f32[128,128], index: 1, kind: input, shape index: {}]
  %s2 = inlined_call_operand.vmem [shape: f32[1,128], index: 2, kind: input, shape index: {}]
  %s3 = inlined_call_operand.hbm [shape: f32[128,128], index: 3, kind: input, shape index: {}]
  %s4 = inlined_call_operand.vmem [shape: f32[1,128], index: 4, kind: input, shape index: {}]
  %s5 = inlined_call_operand.vmem [shape: f32[128,4], index: 5, kind: input, shape index: {}]
  %s6 = inlined_call_operand.vmem [shape: f32[1,4], index: 6, kind: input, shape index: {}]
  %s7 = inlined_call_operand.vmem [shape: f32[8,4], index: 7, kind: output, shape index: {}]
  %s8 = sld [smem:[#allocation0]]
  $region46: #{tpu_custom_call.1} parent=0
    _
  %s10 = ssub.s32 1, %s8
  %s11 = scalar_select 0, %s10, %s8
  $region1: #{tpu_custom_call.1} parent=0
    #allocation2 [shape = 'u8[4096]{0}', space=vmem, size = 0x1000, scoped, tag = 'input window, operand 0, single buffered']
    #allocation3 [shape = 's32[1]{0}', space=sflag, size = 0x4, scoped, tag = 'scoped memory for tpu_custom_call.1']
    #allocation4 [shape = 'u8[65536]{0}', space=vmem, size = 0x10000, scoped, tag = 'input window, operand 3, single buffered']
    #allocation5 [shape = 's32[1]{0}', space=sflag, size = 0x4, scoped, tag = 'scoped memory for tpu_custom_call.1']
    %12 = vsyncpa [#allocation3], 0
    %13 = vsyncpa [#allocation5], 0
    // Predicated region
    $region2: #{tpu_custom_call.1} parent=1 // pred_check
      _
    $region3: #{tpu_custom_call.1} parent=1 // pred_check_branch
      %15 = sbr.rel (0) target = $region5
    $region4: #{tpu_custom_call.1} parent=1 // pred_region
      %s17 = ssub.s32 128, 128
      %18 = vsyncadd [#allocation3], %s17
      %s20 = sshll.u32 [#allocation2], 4
      %s21 = int_to_ptr.vmem [resolvable:$true] %s20
      %23 = dma.hbm_to_vmem [thread:$0]  %s0, 128, %s21, [#allocation3]
    $region5: #{tpu_custom_call.1} parent=1 // pred_fallthru
      _
    // Predicated region
    $region6: #{tpu_custom_call.1} parent=1 // pred_check
      _
    $region7: #{tpu_custom_call.1} parent=1 // pred_check_branch
      %25 = sbr.rel (0) target = $region9
    $region8: #{tpu_custom_call.1} parent=1 // pred_region
      _
    $region9: #{tpu_custom_call.1} parent=1 // pred_fallthru
      _
    // Predicated region
    $region10: #{tpu_custom_call.1} parent=1 // pred_check
      _
    $region11: #{tpu_custom_call.1} parent=1 // pred_check_branch
      %27 = sbr.rel (0) target = $region13
    $region12: #{tpu_custom_call.1} parent=1 // pred_region
      _
    $region13: #{tpu_custom_call.1} parent=1 // pred_fallthru
      _
    // Predicated region
    $region14: #{tpu_custom_call.1} parent=1 // pred_check
      _
    $region15: #{tpu_custom_call.1} parent=1 // pred_check_branch
      %29 = sbr.rel (0) target = $region17
    $region16: #{tpu_custom_call.1} parent=1 // pred_region
      %s31 = ssub.s32 2048, 2048
      %32 = vsyncadd [#allocation5], %s31
      %s33 = sshll.u32 [#allocation4], 4
      %s34 = int_to_ptr.vmem [resolvable:$true] %s33
      %39 = dma.hbm_to_vmem [thread:$0]  %s3, 2048, %s34, [#allocation5], 128, 128, 8
    $region17: #{tpu_custom_call.1} parent=1 // pred_fallthru
      _
    // Predicated region
    $region18: #{tpu_custom_call.1} parent=1 // pred_check
      _
    $region19: #{tpu_custom_call.1} parent=1 // pred_check_branch
      %41 = sbr.rel (0) target = $region21
    $region20: #{tpu_custom_call.1} parent=1 // pred_region
      _
    $region21: #{tpu_custom_call.1} parent=1 // pred_fallthru
      _
    // Predicated region
    $region22: #{tpu_custom_call.1} parent=1 // pred_check
      _
    $region23: #{tpu_custom_call.1} parent=1 // pred_check_branch
      %43 = sbr.rel (0) target = $region25
    $region24: #{tpu_custom_call.1} parent=1 // pred_region
      _
    $region25: #{tpu_custom_call.1} parent=1 // pred_fallthru
      _
    // Predicated region
    $region26: #{tpu_custom_call.1} parent=1 // pred_check
      _
    $region27: #{tpu_custom_call.1} parent=1 // pred_check_branch
      %45 = sbr.rel (0) target = $region29
    $region28: #{tpu_custom_call.1} parent=1 // pred_region
      _
    $region29: #{tpu_custom_call.1} parent=1 // pred_fallthru
      _
    // Predicated region
    $region30: #{tpu_custom_call.1} parent=1 // pred_check
      _
    $region31: #{tpu_custom_call.1} parent=1 // pred_check_branch
      %47 = sbr.rel (0) target = $region33
    $region32: #{tpu_custom_call.1} parent=1 // pred_region
      %48 = dma.done [#allocation3], 128
    $region33: #{tpu_custom_call.1} parent=1 // pred_fallthru
      _
    // Predicated region
    $region34: #{tpu_custom_call.1} parent=1 // pred_check
      _
    $region35: #{tpu_custom_call.1} parent=1 // pred_check_branch
      %50 = sbr.rel (0) target = $region37
    $region36: #{tpu_custom_call.1} parent=1 // pred_region
      %51 = dma.done [#allocation5], 2048
    $region37: #{tpu_custom_call.1} parent=1 // pred_fallthru
      _
    %v52 = vld [vmem:[#allocation2] sm:$0xff]
    %v53 = vld [vmem:[%s1] sm:$0xff]
    %v54 = vld [vmem:[%s1 + $0x8] sm:$0xff]
    %v55 = vld [vmem:[%s1 + $0x10] sm:$0xff]
    %v56 = vld [vmem:[%s1 + $0x18] sm:$0xff]
    %v57 = vld [vmem:[%s1 + $0x20] sm:$0xff]
    %v58 = vld [vmem:[%s1 + $0x28] sm:$0xff]
    %v59 = vld [vmem:[%s1 + $0x30] sm:$0xff]
    %v60 = vld [vmem:[%s1 + $0x38] sm:$0xff]
    %v61 = vld [vmem:[%s1 + $0x40] sm:$0xff]
    %v62 = vld [vmem:[%s1 + $0x48] sm:$0xff]
    %v63 = vld [vmem:[%s1 + $0x50] sm:$0xff]
    %v64 = vld [vmem:[%s1 + $0x58] sm:$0xff]
    %v65 = vld [vmem:[%s1 + $0x60] sm:$0xff]
    %v66 = vld [vmem:[%s1 + $0x68] sm:$0xff]
    %v67 = vld [vmem:[%s1 + $0x70] sm:$0xff]
    %v68 = vld [vmem:[%s1 + $0x78] sm:$0xff]
    %v69 = vld [vmem:[%s2] sm:$0x1]
    %v71 = vlaneseq
    %v72 = vshrl.u32 %v71, 7
    %v73 = vsub.s32 0, %v72
    %v74 = vrot.slane %v69, %v73
    %76 = vmatprep.subr.mxu0 0.0
    %77 = vmatpush1.msra.mxu0 %v53
    %78 = vmatprep.subr.mxu0 0.0
    %79 = vmatpush1.msra.mxu0 %v54
    %80 = vmatprep.subr.mxu0 0.0
    %81 = vmatpush1.msra.mxu0 %v55
    %82 = vmatprep.subr.mxu0 0.0
    %83 = vmatpush1.msra.mxu0 %v56
    %84 = vmatprep.subr.mxu0 0.0
    %85 = vmatpush1.msra.mxu0 %v57
    %86 = vmatprep.subr.mxu0 0.0
    %87 = vmatpush1.msra.mxu0 %v58
    %88 = vmatprep.subr.mxu0 0.0
    %89 = vmatpush1.msra.mxu0 %v59
    %90 = vmatprep.subr.mxu0 0.0
    %91 = vmatpush1.msra.mxu0 %v60
    %92 = vmatprep.subr.mxu0 0.0
    %93 = vmatpush1.msra.mxu0 %v61
    %94 = vmatprep.subr.mxu0 0.0
    %95 = vmatpush1.msra.mxu0 %v62
    %96 = vmatprep.subr.mxu0 0.0
    %97 = vmatpush1.msra.mxu0 %v63
    %98 = vmatprep.subr.mxu0 0.0
    %99 = vmatpush1.msra.mxu0 %v64
    %100 = vmatprep.subr.mxu0 0.0
    %101 = vmatpush1.msra.mxu0 %v65
    %102 = vmatprep.subr.mxu0 0.0
    %103 = vmatpush1.msra.mxu0 %v66
    %104 = vmatprep.subr.mxu0 0.0
    %105 = vmatpush1.msra.mxu0 %v67
    %106 = vmatprep.subr.mxu0 0.0
    %107 = vmatpush1.msra.mxu0 %v68
    %108 = vmatprep.subr.mxu0 0.0
    %109 = vmatpush1.msra.mxu0 0.0
    %110 = vmatprep.subr.mxu0 0.0
    %111 = vmatpush1.msra.mxu0 0.0
    %112 = vmatprep.subr.mxu0 0.0
    %113 = vmatpush1.msra.mxu0 0.0
    %114 = vmatprep.subr.mxu0 0.0
    %115 = vmatpush1.msra.mxu0 0.0
    %116 = vmatprep.subr.mxu0 0.0
    %117 = vmatpush1.msra.mxu0 0.0
    %118 = vmatprep.subr.mxu0 0.0
    %119 = vmatpush1.msra.mxu0 0.0
    %120 = vmatprep.subr.mxu0 0.0
    %121 = vmatpush1.msra.mxu0 0.0
    %122 = vmatprep.subr.mxu0 0.0
    %123 = vmatpush1.msra.mxu0 0.0
    %124 = vmatprep.subr.mxu0 0.0
    %125 = vmatpush1.msra.mxu0 0.0
    %126 = vmatprep.subr.mxu0 0.0
    %127 = vmatpush1.msra.mxu0 0.0
    %128 = vmatprep.subr.mxu0 0.0
    %129 = vmatpush1.msra.mxu0 0.0
    %130 = vmatprep.subr.mxu0 0.0
    %131 = vmatpush1.msra.mxu0 0.0
    %132 = vmatprep.subr.mxu0 0.0
    %133 = vmatpush1.msra.mxu0 0.0
    %134 = vmatprep.subr.mxu0 0.0
    %135 = vmatpush1.msra.mxu0 0.0
    %136 = vmatprep.subr.mxu0 0.0
    %137 = vmatpush1.msra.mxu0 0.0
    %138 = vmatprep.subr.mxu0 0.0
    %139 = vmatpush1.msra.mxu0 0.0
    %140 = vmatprep.mubr.f32.mxu0 0.0
    %141 = vmatmul.mubr.f32.gmra.mrb[0].mxu0 %v52
    %v142 = vpop.f32.mrb[0].mxu0
    %v143 = vadd.f32 %v74, %v142
    %v144 = vpop.f32.mrb[0].mxu0
    %145 = vdwg.mxu0
    %v146 = vmax.f32 %v143, 0.0
    %v147 = vld [vmem:[#allocation4] sm:$0xff]
    %v148 = vld [vmem:[#allocation4 + $0x8] sm:$0xff]
    %v149 = vld [vmem:[#allocation4 + $0x10] sm:$0xff]
    %v150 = vld [vmem:[#allocation4 + $0x18] sm:$0xff]
    %v151 = vld [vmem:[#allocation4 + $0x20] sm:$0xff]
    %v152 = vld [vmem:[#allocation4 + $0x28] sm:$0xff]
    %v153 = vld [vmem:[#allocation4 + $0x30] sm:$0xff]
    %v154 = vld [vmem:[#allocation4 + $0x38] sm:$0xff]
    %v155 = vld [vmem:[#allocation4 + $0x40] sm:$0xff]
    %v156 = vld [vmem:[#allocation4 + $0x48] sm:$0xff]
    %v157 = vld [vmem:[#allocation4 + $0x50] sm:$0xff]
    %v158 = vld [vmem:[#allocation4 + $0x58] sm:$0xff]
    %v159 = vld [vmem:[#allocation4 + $0x60] sm:$0xff]
    %v160 = vld [vmem:[#allocation4 + $0x68] sm:$0xff]
    %v161 = vld [vmem:[#allocation4 + $0x70] sm:$0xff]
    %v162 = vld [vmem:[#allocation4 + $0x78] sm:$0xff]
    %v163 = vld [vmem:[%s4] sm:$0x1]
    %v165 = vlaneseq
    %v166 = vshrl.u32 %v165, 7
    %v167 = vsub.s32 0, %v166
    %v168 = vrot.slane %v163, %v167
    %170 = vmatprep.subr.mxu0 0.0
    %171 = vmatpush1.msra.mxu0 %v147
    %172 = vmatprep.subr.mxu0 0.0
    %173 = vmatpush1.msra.mxu0 %v148
    %174 = vmatprep.subr.mxu0 0.0
    %175 = vmatpush1.msra.mxu0 %v149
    %176 = vmatprep.subr.mxu0 0.0
    %177 = vmatpush1.msra.mxu0 %v150
    %178 = vmatprep.subr.mxu0 0.0
    %179 = vmatpush1.msra.mxu0 %v151
    %180 = vmatprep.subr.mxu0 0.0
    %181 = vmatpush1.msra.mxu0 %v152
    %182 = vmatprep.subr.mxu0 0.0
    %183 = vmatpush1.msra.mxu0 %v153
    %184 = vmatprep.subr.mxu0 0.0
    %185 = vmatpush1.msra.mxu0 %v154
    %186 = vmatprep.subr.mxu0 0.0
    %187 = vmatpush1.msra.mxu0 %v155
    %188 = vmatprep.subr.mxu0 0.0
    %189 = vmatpush1.msra.mxu0 %v156
    %190 = vmatprep.subr.mxu0 0.0
    %191 = vmatpush1.msra.mxu0 %v157
    %192 = vmatprep.subr.mxu0 0.0
    %193 = vmatpush1.msra.mxu0 %v158
    %194 = vmatprep.subr.mxu0 0.0
    %195 = vmatpush1.msra.mxu0 %v159
    %196 = vmatprep.subr.mxu0 0.0
    %197 = vmatpush1.msra.mxu0 %v160
    %198 = vmatprep.subr.mxu0 0.0
    %199 = vmatpush1.msra.mxu0 %v161
    %200 = vmatprep.subr.mxu0 0.0
    %201 = vmatpush1.msra.mxu0 %v162
    %202 = vmatprep.subr.mxu0 0.0
    %203 = vmatpush1.msra.mxu0 0.0
    %204 = vmatprep.subr.mxu0 0.0
    %205 = vmatpush1.msra.mxu0 0.0
    %206 = vmatprep.subr.mxu0 0.0
    %207 = vmatpush1.msra.mxu0 0.0
    %208 = vmatprep.subr.mxu0 0.0
    %209 = vmatpush1.msra.mxu0 0.0
    %210 = vmatprep.subr.mxu0 0.0
    %211 = vmatpush1.msra.mxu0 0.0
    %212 = vmatprep.subr.mxu0 0.0
    %213 = vmatpush1.msra.mxu0 0.0
    %214 = vmatprep.subr.mxu0 0.0
    %215 = vmatpush1.msra.mxu0 0.0
    %216 = vmatprep.subr.mxu0 0.0
    %217 = vmatpush1.msra.mxu0 0.0
    %218 = vmatprep.subr.mxu0 0.0
    %219 = vmatpush1.msra.mxu0 0.0
    %220 = vmatprep.subr.mxu0 0.0
    %221 = vmatpush1.msra.mxu0 0.0
    %222 = vmatprep.subr.mxu0 0.0
    %223 = vmatpush1.msra.mxu0 0.0
    %224 = vmatprep.subr.mxu0 0.0
    %225 = vmatpush1.msra.mxu0 0.0
    %226 = vmatprep.subr.mxu0 0.0
    %227 = vmatpush1.msra.mxu0 0.0
    %228 = vmatprep.subr.mxu0 0.0
    %229 = vmatpush1.msra.mxu0 0.0
    %230 = vmatprep.subr.mxu0 0.0
    %231 = vmatpush1.msra.mxu0 0.0
    %232 = vmatprep.subr.mxu0 0.0
    %233 = vmatpush1.msra.mxu0 0.0
    %234 = vmatprep.mubr.f32.mxu0 0.0
    %235 = vmatmul.mubr.f32.gmra.mrb[0].mxu0 %v146
    %v236 = vpop.f32.mrb[0].mxu0
    %v237 = vadd.f32 %v168, %v236
    %v238 = vpop.f32.mrb[0].mxu0
    %239 = vdwg.mxu0
    %v240 = vmax.f32 %v237, 0.0
    %v241 = vld [vmem:[%s5] sm:$0xff]
    %v242 = vld [vmem:[%s5 + $0x8] sm:$0xff]
    %v243 = vld [vmem:[%s5 + $0x10] sm:$0xff]
    %v244 = vld [vmem:[%s5 + $0x18] sm:$0xff]
    %v245 = vld [vmem:[%s5 + $0x20] sm:$0xff]
    %v246 = vld [vmem:[%s5 + $0x28] sm:$0xff]
    %v247 = vld [vmem:[%s5 + $0x30] sm:$0xff]
    %v248 = vld [vmem:[%s5 + $0x38] sm:$0xff]
    %v249 = vld [vmem:[%s5 + $0x40] sm:$0xff]
    %v250 = vld [vmem:[%s5 + $0x48] sm:$0xff]
    %v251 = vld [vmem:[%s5 + $0x50] sm:$0xff]
    %v252 = vld [vmem:[%s5 + $0x58] sm:$0xff]
    %v253 = vld [vmem:[%s5 + $0x60] sm:$0xff]
    %v254 = vld [vmem:[%s5 + $0x68] sm:$0xff]
    %v255 = vld [vmem:[%s5 + $0x70] sm:$0xff]
    %v256 = vld [vmem:[%s5 + $0x78] sm:$0xff]
    %v257 = vld [vmem:[%s6] sm:$0x1]
    %v259 = vlaneseq
    %v260 = vshrl.u32 %v259, 7
    %v261 = vsub.s32 0, %v260
    %v262 = vrot.slane %v257, %v261
    %264 = vmatprep.subr.mxu0 0.0
    %265 = vmatpush1.msra.mxu0 %v241
    %266 = vmatprep.subr.mxu0 0.0
    %267 = vmatpush1.msra.mxu0 %v242
    %268 = vmatprep.subr.mxu0 0.0
    %269 = vmatpush1.msra.mxu0 %v243
    %270 = vmatprep.subr.mxu0 0.0
    %271 = vmatpush1.msra.mxu0 %v244
    %272 = vmatprep.subr.mxu0 0.0
    %273 = vmatpush1.msra.mxu0 %v245
    %274 = vmatprep.subr.mxu0 0.0
    %275 = vmatpush1.msra.mxu0 %v246
    %276 = vmatprep.subr.mxu0 0.0
    %277 = vmatpush1.msra.mxu0 %v247
    %278 = vmatprep.subr.mxu0 0.0
    %279 = vmatpush1.msra.mxu0 %v248
    %280 = vmatprep.subr.mxu0 0.0
    %281 = vmatpush1.msra.mxu0 %v249
    %282 = vmatprep.subr.mxu0 0.0
    %283 = vmatpush1.msra.mxu0 %v250
    %284 = vmatprep.subr.mxu0 0.0
    %285 = vmatpush1.msra.mxu0 %v251
    %286 = vmatprep.subr.mxu0 0.0
    %287 = vmatpush1.msra.mxu0 %v252
    %288 = vmatprep.subr.mxu0 0.0
    %289 = vmatpush1.msra.mxu0 %v253
    %290 = vmatprep.subr.mxu0 0.0
    %291 = vmatpush1.msra.mxu0 %v254
    %292 = vmatprep.subr.mxu0 0.0
    %293 = vmatpush1.msra.mxu0 %v255
    %294 = vmatprep.subr.mxu0 0.0
    %295 = vmatpush1.msra.mxu0 %v256
    %296 = vmatprep.subr.mxu0 0.0
    %297 = vmatpush1.msra.mxu0 0.0
    %298 = vmatprep.subr.mxu0 0.0
    %299 = vmatpush1.msra.mxu0 0.0
    %300 = vmatprep.subr.mxu0 0.0
    %301 = vmatpush1.msra.mxu0 0.0
    %302 = vmatprep.subr.mxu0 0.0
    %303 = vmatpush1.msra.mxu0 0.0
    %304 = vmatprep.subr.mxu0 0.0
    %305 = vmatpush1.msra.mxu0 0.0
    %306 = vmatprep.subr.mxu0 0.0
    %307 = vmatpush1.msra.mxu0 0.0
    %308 = vmatprep.subr.mxu0 0.0
    %309 = vmatpush1.msra.mxu0 0.0
    %310 = vmatprep.subr.mxu0 0.0
    %311 = vmatpush1.msra.mxu0 0.0
    %312 = vmatprep.subr.mxu0 0.0
    %313 = vmatpush1.msra.mxu0 0.0
    %314 = vmatprep.subr.mxu0 0.0
    %315 = vmatpush1.msra.mxu0 0.0
    %316 = vmatprep.subr.mxu0 0.0
    %317 = vmatpush1.msra.mxu0 0.0
    %318 = vmatprep.subr.mxu0 0.0
    %319 = vmatpush1.msra.mxu0 0.0
    %320 = vmatprep.subr.mxu0 0.0
    %321 = vmatpush1.msra.mxu0 0.0
    %322 = vmatprep.subr.mxu0 0.0
    %323 = vmatpush1.msra.mxu0 0.0
    %324 = vmatprep.subr.mxu0 0.0
    %325 = vmatpush1.msra.mxu0 0.0
    %326 = vmatprep.subr.mxu0 0.0
    %327 = vmatpush1.msra.mxu0 0.0
    %328 = vmatprep.mubr.f32.mxu0 0.0
    %329 = vmatmul.mubr.f32.gmra.mrb[0].mxu0 %v240
    %v330 = vpop.f32.mrb[0].mxu0
    %v331 = vadd.f32 %v262, %v330
    %v332 = vpop.f32.mrb[0].mxu0
    %333 = vdwg.mxu0
    %vm334 = vcmask 31744
    %335 = vst.msk [vmem:[%s7] sm:$0xff] %vm334, %v331
    // Predicated region
    $region38: #{tpu_custom_call.1} parent=1 // pred_check
      _
    $region39: #{tpu_custom_call.1} parent=1 // pred_check_branch
      %337 = sbr.rel (0) target = $region41
    $region40: #{tpu_custom_call.1} parent=1 // pred_region
      _
    $region41: #{tpu_custom_call.1} parent=1 // pred_fallthru
      _
    // Predicated region
    $region42: #{tpu_custom_call.1} parent=1 // pred_check
      _
    $region43: #{tpu_custom_call.1} parent=1 // pred_check_branch
      %339 = sbr.rel (0) target = $region45
    $region44: #{tpu_custom_call.1} parent=1 // pred_region
      _
    $region45: #{tpu_custom_call.1} parent=1 // pred_fallthru
      _
    %340 = vsyncpa [#allocation3], 1
    %341 = vsyncpa [#allocation5], 1

</llo_original>
